<compile_context>
chip_gen: v6e
topology: v6e:2x2x1
jax: 0.10.0
libtpu: 0.0.40
codegen_flags: <defaults>
</compile_context>

<pallas_src>
import functools

import jax
import jax.numpy as jnp
from jax.experimental import pallas as pl
from jax.experimental.pallas import tpu as pltpu


def _round_up(x, m):
    return ((x + m - 1) // m) * m


def prenet_kernel(*refs, threshold, inv_keep, use_dropout):
    if use_dropout:
        (x_ref, w1_ref, b1_ref, w2_ref, b2_ref,
         bits1_ref, bits2_ref, o_ref) = refs
    else:
        x_ref, w1_ref, b1_ref, w2_ref, b2_ref, o_ref = refs

    x = x_ref[...]
    b1 = b1_ref[...]            # (1, hidden_p) -- broadcast handled by VPU
    b2 = b2_ref[...]            # (1, d_out_p)

    # fc1 + relu
    h = jnp.dot(x, w1_ref[...], preferred_element_type=jnp.float32) + b1
    h = jnp.maximum(h, 0.0)

    if use_dropout:
        # Inverted dropout: keep iff bits >= rate * 2^32 (integer compare,
        # no float-uniform conversion chain).
        keep1 = bits1_ref[...] >= jnp.uint32(threshold)
        h = jnp.where(keep1, h * jnp.float32(inv_keep), jnp.float32(0.0))

    # fc2 + relu
    y = jnp.dot(h.astype(w2_ref.dtype), w2_ref[...],
                preferred_element_type=jnp.float32) + b2
    y = jnp.maximum(y, 0.0)

    if use_dropout:
        keep2 = bits2_ref[...] >= jnp.uint32(threshold)
        y = jnp.where(keep2, y * jnp.float32(inv_keep), jnp.float32(0.0))

    o_ref[...] = y.astype(o_ref.dtype)


def prenet_forward(x, params, *, dropout_rate, key=None, training=True,
                   tm=256):
    """x: [..., input_size]; returns [..., output_size].

    params = (w1, b1, w2, b2) with PyTorch Linear layout (W is [out, in]).
    """
    w1, b1, w2, b2 = params
    lead = x.shape[:-1]
    d_in = x.shape[-1]
    hidden = w1.shape[0]
    d_out = w2.shape[0]
    dtype = x.dtype

    x2 = x.reshape(-1, d_in)
    n = x2.shape[0]

    # ---- padding: lanes to multiples of 128, rows to a multiple of the tile.
    d_in_p = _round_up(d_in, 128)
    hid_p = _round_up(hidden, 128)
    d_out_p = _round_up(d_out, 128)

    tm_eff = min(_round_up(max(tm, 8), 8), _round_up(n, 8))  # multiple of 8
    n_p = _round_up(n, tm_eff)

    xp = jnp.zeros((n_p, d_in_p), dtype).at[:n, :d_in].set(x2)
    w1t = jnp.zeros((d_in_p, hid_p), dtype).at[:d_in, :hidden].set(
        jnp.asarray(w1, dtype).T)
    b1p = jnp.zeros((1, hid_p), dtype).at[0, :hidden].set(
        jnp.asarray(b1, dtype))
    w2t = jnp.zeros((hid_p, d_out_p), dtype).at[:hidden, :d_out].set(
        jnp.asarray(w2, dtype).T)
    b2p = jnp.zeros((1, d_out_p), dtype).at[0, :d_out].set(
        jnp.asarray(b2, dtype))

    rate = float(dropout_rate)
    use_dropout = bool(training) and rate > 0.0

    threshold = 0
    inv_keep = 1.0
    extra_args = []
    extra_specs = []
    if use_dropout:
        if key is None:
            key = jax.random.PRNGKey(0)
        threshold = min(int(round(rate * (1 << 32))), (1 << 32) - 1)
        inv_keep = 1.0 / (1.0 - rate)
        k1, k2 = jax.random.split(key)
        # TODO(synk): torch.nn.Dropout's exact RNG stream cannot be
        # reproduced; Bernoulli(1-p) keep + 1/(1-p) scaling semantics match.
        bits1 = jax.random.bits(k1, (n_p, hid_p), dtype=jnp.uint32)
        bits2 = jax.random.bits(k2, (n_p, d_out_p), dtype=jnp.uint32)
        extra_args = [bits1, bits2]
        extra_specs = [
            pl.BlockSpec((tm_eff, hid_p), lambda i: (i, 0)),
            pl.BlockSpec((tm_eff, d_out_p), lambda i: (i, 0)),
        ]

    kernel = functools.partial(prenet_kernel,
                               threshold=threshold,
                               inv_keep=inv_keep,
                               use_dropout=use_dropout)

    in_specs = [
        pl.BlockSpec((tm_eff, d_in_p), lambda i: (i, 0)),   # x row tile
        pl.BlockSpec((d_in_p, hid_p), lambda i: (0, 0)),    # W1^T (resident)
        pl.BlockSpec((1, hid_p), lambda i: (0, 0)),         # b1
        pl.BlockSpec((hid_p, d_out_p), lambda i: (0, 0)),   # W2^T (resident)
        pl.BlockSpec((1, d_out_p), lambda i: (0, 0)),       # b2
    ] + extra_specs

    # Rough VMEM budget (double-buffered tiled operands + resident weights +
    # f32 intermediate), kept under v7x's 64 MiB per-TC VMEM.
    bpe = jnp.dtype(dtype).itemsize
    est = (2 * tm_eff * (d_in_p + d_out_p) * bpe
           + (2 * tm_eff * (hid_p + d_out_p) * 4 if use_dropout else 0)
           + 2 * (d_in_p * hid_p + hid_p * d_out_p + hid_p + d_out_p) * bpe
           + tm_eff * hid_p * 4)
    vmem_limit = int(min(64 * 1024 * 1024, max(16 * 1024 * 1024, 2 * est)))

    out = pl.pallas_call(
        kernel,
        out_shape=jax.ShapeDtypeStruct((n_p, d_out_p), dtype),
        grid_spec=pltpu.PrefetchScalarGridSpec(
            num_scalar_prefetch=0,
            grid=(n_p // tm_eff,),
            in_specs=in_specs,
            out_specs=pl.BlockSpec((tm_eff, d_out_p), lambda i: (i, 0)),
        ),
        compiler_params=pltpu.CompilerParams(
            dimension_semantics=("parallel",),   # independent row tiles
            vmem_limit_bytes=vmem_limit),
    )(xp, w1t, b1p, w2t, b2p, *extra_args)

    return out[:n, :d_out].reshape(*lead, d_out)


def init_prenet_params(key, input_size, hidden_size, output_size,
                       dtype=jnp.float32):
    """PyTorch nn.Linear default init (uniform +/- 1/sqrt(fan_in)),
    W stored PyTorch-style as [out, in]."""
    k1, k2, k3, k4 = jax.random.split(key, 4)
    bound1 = 1.0 / (input_size ** 0.5)
    bound2 = 1.0 / (hidden_size ** 0.5)
    w1 = jax.random.uniform(k1, (hidden_size, input_size), dtype, -bound1, bound1)
    b1 = jax.random.uniform(k2, (hidden_size,), dtype, -bound1, bound1)
    w2 = jax.random.uniform(k3, (output_size, hidden_size), dtype, -bound2, bound2)
    b2 = jax.random.uniform(k4, (output_size,), dtype, -bound2, bound2)
    return (w1, b1, w2, b2)


def _prenet_ref_eval(x, params):
    """Pure-JAX reference for the eval (no-dropout) path."""
    w1, b1, w2, b2 = params
    h = jnp.maximum(x @ w1.T + b1, 0.0)
    return jnp.maximum(h @ w2.T + b2, 0.0)


if __name__ == "__main__":
    batch, seq = 2, 8
    input_size, hidden_size, output_size = 32, 64, 32
    dropout_rate = 0.5

    key = jax.random.PRNGKey(0)
    kx, kp, kd = jax.random.split(key, 3)
    x = jax.random.normal(kx, (batch, seq, input_size), dtype=jnp.float32)
    params = init_prenet_params(kp, input_size, hidden_size, output_size)

    # Eval path (deterministic): compare against pure-JAX reference.
    y_eval = prenet_forward(x, params, dropout_rate=dropout_rate,
                            training=False)
    y_eval = jax.block_until_ready(y_eval)
    y_ref = _prenet_ref_eval(x, params)
    assert y_eval.shape == (batch, seq, output_size)
    assert bool(jnp.allclose(y_eval, y_ref, atol=1e-5, rtol=1e-5))

    # Training path (with dropout): semantic sanity checks.
    y_train = prenet_forward(x, params, dropout_rate=dropout_rate,
                             key=kd, training=True)
    y_train = jax.block_until_ready(y_train)
    assert y_train.shape == (batch, seq, output_size)
    assert bool(jnp.all(y_train >= 0.0))        # ReLU + dropout can't go negative
    assert bool(jnp.all(jnp.isfinite(y_train)))

    print("KERNEL_OK")
</pallas_src>

<mosaic_0001>
module attributes {stable_mosaic.version = 11 : i64} {
  func.func @prenet_kernel(%arg0: i32, %arg1: memref<16x128xf32, #tpu.memory_space<vmem>>, %arg2: memref<128x128xf32, #tpu.memory_space<vmem>>, %arg3: memref<1x128xf32, #tpu.memory_space<vmem>>, %arg4: memref<128x128xf32, #tpu.memory_space<vmem>>, %arg5: memref<1x128xf32, #tpu.memory_space<vmem>>, %arg6: memref<16x128xf32, #tpu.memory_space<vmem>>) attributes {dimension_semantics = [#tpu.dimension_semantics<parallel>], iteration_bounds = array<i64: 1>, scalar_prefetch = 0 : i64, scratch_operands = 0 : i64, tpu.core_type = #tpu.core_type<tc>, window_params = [{transform_indices = @transform_0, window_bounds = array<i64: 16, 128>}, {pipeline_mode = #tpu.pipeline_mode<synchronous>, transform_indices = @transform_1, window_bounds = array<i64: 128, 128>}, {pipeline_mode = #tpu.pipeline_mode<synchronous>, transform_indices = @transform_2, window_bounds = array<i64: 1, 128>}, {pipeline_mode = #tpu.pipeline_mode<synchronous>, transform_indices = @transform_3, window_bounds = array<i64: 128, 128>}, {pipeline_mode = #tpu.pipeline_mode<synchronous>, transform_indices = @transform_4, window_bounds = array<i64: 1, 128>}, {transform_indices = @transform_5, window_bounds = array<i64: 16, 128>}]} {
    %c0 = arith.constant 0 : index
    %c0_0 = arith.constant 0 : index
    %0 = vector.load %arg1[%c0, %c0_0] : memref<16x128xf32, #tpu.memory_space<vmem>>, vector<16x128xf32>
    %c0_1 = arith.constant 0 : index
    %c0_2 = arith.constant 0 : index
    %1 = vector.load %arg3[%c0_1, %c0_2] : memref<1x128xf32, #tpu.memory_space<vmem>>, vector<1x128xf32>
    %c0_3 = arith.constant 0 : index
    %c0_4 = arith.constant 0 : index
    %2 = vector.load %arg5[%c0_3, %c0_4] : memref<1x128xf32, #tpu.memory_space<vmem>>, vector<1x128xf32>
    %c0_5 = arith.constant 0 : index
    %c0_6 = arith.constant 0 : index
    %3 = vector.load %arg2[%c0_5, %c0_6] : memref<128x128xf32, #tpu.memory_space<vmem>>, vector<128x128xf32>
    %cst = arith.constant dense<0.000000e+00> : vector<16x128xf32>
    %4 = tpu.matmul %0, %3, %cst {dimension_numbers = #tpu.dot_dimension_numbers<[1], [0], [0], [1], [0, 0, 1, 1], [], []>} : vector<16x128xf32>, vector<128x128xf32>, vector<16x128xf32> -> vector<16x128xf32>
    %5 = vector.broadcast %1 : vector<1x128xf32> to vector<16x128xf32>
    %6 = arith.addf %4, %5 : vector<16x128xf32>
    %cst_7 = arith.constant 0.000000e+00 : f32
    %7 = vector.broadcast %cst_7 : f32 to vector<16x128xf32>
    %8 = arith.maximumf %6, %7 : vector<16x128xf32>
    %c0_8 = arith.constant 0 : index
    %c0_9 = arith.constant 0 : index
    %9 = vector.load %arg4[%c0_8, %c0_9] : memref<128x128xf32, #tpu.memory_space<vmem>>, vector<128x128xf32>
    %cst_10 = arith.constant dense<0.000000e+00> : vector<16x128xf32>
    %10 = tpu.matmul %8, %9, %cst_10 {dimension_numbers = #tpu.dot_dimension_numbers<[1], [0], [0], [1], [0, 0, 1, 1], [], []>} : vector<16x128xf32>, vector<128x128xf32>, vector<16x128xf32> -> vector<16x128xf32>
    %11 = vector.broadcast %2 : vector<1x128xf32> to vector<16x128xf32>
    %12 = arith.addf %10, %11 : vector<16x128xf32>
    %cst_11 = arith.constant 0.000000e+00 : f32
    %13 = vector.broadcast %cst_11 : f32 to vector<16x128xf32>
    %14 = arith.maximumf %12, %13 : vector<16x128xf32>
    %c0_12 = arith.constant 0 : index
    %c0_13 = arith.constant 0 : index
    %15 = vector.load %arg6[%c0_12, %c0_13] : memref<16x128xf32, #tpu.memory_space<vmem>>, vector<16x128xf32>
    tpu.vector_store %arg6[%c0_12, %c0_13], %14 {strides = array<i32>} : memref<16x128xf32, #tpu.memory_space<vmem>>, vector<16x128xf32>,
    return
  }
  func.func @transform_0(%arg0: i32) -> (i32, i32) {
    %c0_i32 = arith.constant 0 : i32
    %c0_i32_0 = arith.constant 0 : i32
    return %arg0, %c0_i32 : i32, i32
  }
  func.func @transform_1(%arg0: i32) -> (i32, i32) {
    %c0_i32 = arith.constant 0 : i32
    %c0_i32_0 = arith.constant 0 : i32
    %c0_i32_1 = arith.constant 0 : i32
    return %c0_i32, %c0_i32_0 : i32, i32
  }
  func.func @transform_2(%arg0: i32) -> (i32, i32) {
    %c0_i32 = arith.constant 0 : i32
    %c0_i32_0 = arith.constant 0 : i32
    %c0_i32_1 = arith.constant 0 : i32
    return %c0_i32, %c0_i32_0 : i32, i32
  }
  func.func @transform_3(%arg0: i32) -> (i32, i32) {
    %c0_i32 = arith.constant 0 : i32
    %c0_i32_0 = arith.constant 0 : i32
    %c0_i32_1 = arith.constant 0 : i32
    return %c0_i32, %c0_i32_0 : i32, i32
  }
  func.func @transform_4(%arg0: i32) -> (i32, i32) {
    %c0_i32 = arith.constant 0 : i32
    %c0_i32_0 = arith.constant 0 : i32
    %c0_i32_1 = arith.constant 0 : i32
    return %c0_i32, %c0_i32_0 : i32, i32
  }
  func.func @transform_5(%arg0: i32) -> (i32, i32) {
    %c0_i32 = arith.constant 0 : i32
    %c0_i32_0 = arith.constant 0 : i32
    return %arg0, %c0_i32 : i32, i32
  }
}

</mosaic_0001>

<llo_original>
// kernel: tpu_custom_call.1
$region0: #{tpu_custom_call.1}
  #allocation0 [shape = 'u32[]', space=smem, size = 0x4, offset = 0x4, fixed_abs, tag = 'smem constant byte address 0x4 - core index']
  #allocation1 [shape = 'u32[144,128]{1,0:T(1,128)}', space=vmem, size = 0x12000, scoped, tag = 'internal scratch']
  %s0 = inlined_call_operand.hbm [shape: f32[16,128], index: 0, kind: input, shape index: {}]
  %s1 = inlined_call_operand.hbm [shape: f32[128,128], index: 1, kind: input, shape index: {}]
  %s2 = inlined_call_operand.vmem [shape: f32[1,128], index: 2, kind: input, shape index: {}]
  %s3 = inlined_call_operand.hbm [shape: f32[128,128], index: 3, kind: input, shape index: {}]
  %s4 = inlined_call_operand.vmem [shape: f32[1,128], index: 4, kind: input, shape index: {}]
  %s5 = inlined_call_operand.hbm [shape: f32[16,128], index: 5, kind: output, shape index: {}]
  %s6 = sld [smem:[#allocation0]]
  $region42: #{tpu_custom_call.1} parent=0
    _
  %s8 = ssub.s32 1, %s6
  %s9 = scalar_select 0, %s8, %s6
  $region1: #{tpu_custom_call.1} parent=0
    #allocation2 [shape = 'u8[8192]{0}', space=vmem, size = 0x2000, scoped, tag = 'input window, operand 0, single buffered']
    #allocation3 [shape = 's32[1]{0}', space=sflag, size = 0x4, scoped, tag = 'scoped memory for tpu_custom_call.1']
    #allocation4 [shape = 's32[1]{0}', space=sflag, size = 0x4, scoped, tag = 'scoped memory for tpu_custom_call.1']
    #allocation5 [shape = 'u8[65536]{0}', space=vmem, size = 0x10000, scoped, tag = 'input window, operand 1, single buffered']
    #allocation6 [shape = 's32[1]{0}', space=sflag, size = 0x4, scoped, tag = 'scoped memory for tpu_custom_call.1']
    #allocation7 [shape = 'u8[65536]{0}', space=vmem, size = 0x10000, scoped, tag = 'input window, operand 3, single buffered']
    #allocation8 [shape = 'u8[8192]{0}', space=vmem, size = 0x2000, scoped, tag = 'output window, operand 0, single buffered']
    %10 = vsyncpa [#allocation3], 0
    %11 = vsyncpa [#allocation6], 0
    %12 = vsyncpa [#allocation4], 0
    // Predicated region
    $region2: #{tpu_custom_call.1} parent=1 // pred_check
      _
    $region3: #{tpu_custom_call.1} parent=1 // pred_check_branch
      %14 = sbr.rel (0) target = $region5
    $region4: #{tpu_custom_call.1} parent=1 // pred_region
      %s16 = ssub.s32 256, 256
      %17 = vsyncadd [#allocation3], %s16
      %s18 = sshll.u32 [#allocation2], 4
      %s19 = int_to_ptr.vmem [resolvable:$true] %s18
      %24 = dma.hbm_to_vmem [thread:$0]  %s0, 256, %s19, [#allocation3], 128, 128, 8
    $region5: #{tpu_custom_call.1} parent=1 // pred_fallthru
      _
    // Predicated region
    $region6: #{tpu_custom_call.1} parent=1 // pred_check
      _
    $region7: #{tpu_custom_call.1} parent=1 // pred_check_branch
      %26 = sbr.rel (0) target = $region9
    $region8: #{tpu_custom_call.1} parent=1 // pred_region
      %s28 = ssub.s32 2048, 2048
      %29 = vsyncadd [#allocation6], %s28
      %s30 = sshll.u32 [#allocation5], 4
      %s31 = int_to_ptr.vmem [resolvable:$true] %s30
      %36 = dma.hbm_to_vmem [thread:$0]  %s1, 2048, %s31, [#allocation6], 128, 128, 8
    $region9: #{tpu_custom_call.1} parent=1 // pred_fallthru
      _
    // Predicated region
    $region10: #{tpu_custom_call.1} parent=1 // pred_check
      _
    $region11: #{tpu_custom_call.1} parent=1 // pred_check_branch
      %38 = sbr.rel (0) target = $region13
    $region12: #{tpu_custom_call.1} parent=1 // pred_region
      _
    $region13: #{tpu_custom_call.1} parent=1 // pred_fallthru
      _
    // Predicated region
    $region14: #{tpu_custom_call.1} parent=1 // pred_check
      _
    $region15: #{tpu_custom_call.1} parent=1 // pred_check_branch
      %40 = sbr.rel (0) target = $region17
    $region16: #{tpu_custom_call.1} parent=1 // pred_region
      %s42 = ssub.s32 2048, 2048
      %43 = vsyncadd [#allocation6], %s42
      %s44 = sshll.u32 [#allocation7], 4
      %s45 = int_to_ptr.vmem [resolvable:$true] %s44
      %50 = dma.hbm_to_vmem [thread:$0]  %s3, 2048, %s45, [#allocation6], 128, 128, 8
    $region17: #{tpu_custom_call.1} parent=1 // pred_fallthru
      _
    // Predicated region
    $region18: #{tpu_custom_call.1} parent=1 // pred_check
      _
    $region19: #{tpu_custom_call.1} parent=1 // pred_check_branch
      %52 = sbr.rel (0) target = $region21
    $region20: #{tpu_custom_call.1} parent=1 // pred_region
      _
    $region21: #{tpu_custom_call.1} parent=1 // pred_fallthru
      _
    // Predicated region
    $region22: #{tpu_custom_call.1} parent=1 // pred_check
      _
    $region23: #{tpu_custom_call.1} parent=1 // pred_check_branch
      %54 = sbr.rel (0) target = $region25
    $region24: #{tpu_custom_call.1} parent=1 // pred_region
      %55 = dma.done [#allocation3], 256
    $region25: #{tpu_custom_call.1} parent=1 // pred_fallthru
      _
    // Predicated region
    $region26: #{tpu_custom_call.1} parent=1 // pred_check
      _
    $region27: #{tpu_custom_call.1} parent=1 // pred_check_branch
      %57 = sbr.rel (0) target = $region29
    $region28: #{tpu_custom_call.1} parent=1 // pred_region
      %58 = dma.done [#allocation6], 2048
    $region29: #{tpu_custom_call.1} parent=1 // pred_fallthru
      _
    // Predicated region
    $region30: #{tpu_custom_call.1} parent=1 // pred_check
      _
    $region31: #{tpu_custom_call.1} parent=1 // pred_check_branch
      %60 = sbr.rel (0) target = $region33
    $region32: #{tpu_custom_call.1} parent=1 // pred_region
      %61 = dma.done [#allocation6], 2048
    $region33: #{tpu_custom_call.1} parent=1 // pred_fallthru
      _
    %v62 = vld [vmem:[#allocation2] sm:$0xff]
    %v63 = vld [vmem:[#allocation2 + $0x8] sm:$0xff]
    %v64 = vld [vmem:[%s2] sm:$0x1]
    %v65 = vld [vmem:[%s4] sm:$0x1]
    %v66 = vld [vmem:[#allocation5] sm:$0xff]
    %v67 = vld [vmem:[#allocation5 + $0x8] sm:$0xff]
    %v68 = vld [vmem:[#allocation5 + $0x10] sm:$0xff]
    %v69 = vld [vmem:[#allocation5 + $0x18] sm:$0xff]
    %v70 = vld [vmem:[#allocation5 + $0x20] sm:$0xff]
    %v71 = vld [vmem:[#allocation5 + $0x28] sm:$0xff]
    %v72 = vld [vmem:[#allocation5 + $0x30] sm:$0xff]
    %v73 = vld [vmem:[#allocation5 + $0x38] sm:$0xff]
    %v74 = vld [vmem:[#allocation5 + $0x40] sm:$0xff]
    %v75 = vld [vmem:[#allocation5 + $0x48] sm:$0xff]
    %v76 = vld [vmem:[#allocation5 + $0x50] sm:$0xff]
    %v77 = vld [vmem:[#allocation5 + $0x58] sm:$0xff]
    %v78 = vld [vmem:[#allocation5 + $0x60] sm:$0xff]
    %v79 = vld [vmem:[#allocation5 + $0x68] sm:$0xff]
    %v80 = vld [vmem:[#allocation5 + $0x70] sm:$0xff]
    %v81 = vld [vmem:[#allocation5 + $0x78] sm:$0xff]
    %v83 = vlaneseq
    %v84 = vshrl.u32 %v83, 7
    %v85 = vsub.s32 0, %v84
    %v86 = vrot.slane %v64, %v85
    %88 = vmatprep.subr.mxu0 0.0
    %89 = vmatpush1.msra.mxu0 %v81
    %90 = vmatprep.subr.mxu0 0.0
    %91 = vmatpush1.msra.mxu0 %v80
    %92 = vmatprep.subr.mxu0 0.0
    %93 = vmatpush1.msra.mxu0 %v79
    %94 = vmatprep.subr.mxu0 0.0
    %95 = vmatpush1.msra.mxu0 %v78
    %96 = vmatprep.subr.mxu0 0.0
    %97 = vmatpush1.msra.mxu0 %v77
    %98 = vmatprep.subr.mxu0 0.0
    %99 = vmatpush1.msra.mxu0 %v76
    %100 = vmatprep.subr.mxu0 0.0
    %101 = vmatpush1.msra.mxu0 %v75
    %102 = vmatprep.subr.mxu0 0.0
    %103 = vmatpush1.msra.mxu0 %v74
    %104 = vmatprep.subr.mxu0 0.0
    %105 = vmatpush1.msra.mxu0 %v73
    %106 = vmatprep.subr.mxu0 0.0
    %107 = vmatpush1.msra.mxu0 %v72
    %108 = vmatprep.subr.mxu0 0.0
    %109 = vmatpush1.msra.mxu0 %v71
    %110 = vmatprep.subr.mxu0 0.0
    %111 = vmatpush1.msra.mxu0 %v70
    %112 = vmatprep.subr.mxu0 0.0
    %113 = vmatpush1.msra.mxu0 %v69
    %114 = vmatprep.subr.mxu0 0.0
    %115 = vmatpush1.msra.mxu0 %v68
    %116 = vmatprep.subr.mxu0 0.0
    %117 = vmatpush1.msra.mxu0 %v67
    %118 = vmatprep.subr.mxu0 0.0
    %119 = vmatpush1.msra.mxu0 %v66
    %120 = vmatprep.subr.mxu0 0.0
    %121 = vmatpush2.msra.mxu0 0.0
    %122 = vmatprep.subr.mxu0 0.0
    %123 = vmatpush2.msra.mxu0 0.0
    %124 = vmatprep.subr.mxu0 0.0
    %125 = vmatpush2.msra.mxu0 0.0
    %126 = vmatprep.subr.mxu0 0.0
    %127 = vmatpush2.msra.mxu0 0.0
    %128 = vmatprep.subr.mxu0 0.0
    %129 = vmatpush2.msra.mxu0 0.0
    %130 = vmatprep.subr.mxu0 0.0
    %131 = vmatpush2.msra.mxu0 0.0
    %132 = vmatprep.subr.mxu0 0.0
    %133 = vmatpush2.msra.mxu0 0.0
    %134 = vmatprep.subr.mxu0 0.0
    %135 = vmatpush2.msra.mxu0 0.0
    %136 = vmatprep.subr.mxu0 0.0
    %137 = vmatpush2.msra.mxu0 0.0
    %138 = vmatprep.subr.mxu0 0.0
    %139 = vmatpush2.msra.mxu0 0.0
    %140 = vmatprep.subr.mxu0 0.0
    %141 = vmatpush2.msra.mxu0 0.0
    %142 = vmatprep.subr.mxu0 0.0
    %143 = vmatpush2.msra.mxu0 0.0
    %144 = vmatprep.subr.mxu0 0.0
    %145 = vmatpush2.msra.mxu0 0.0
    %146 = vmatprep.subr.mxu0 0.0
    %147 = vmatpush2.msra.mxu0 0.0
    %148 = vmatprep.subr.mxu0 0.0
    %149 = vmatpush2.msra.mxu0 0.0
    %150 = vmatprep.subr.mxu0 0.0
    %151 = vmatpush2.msra.mxu0 0.0
    %152 = vmatprep.mubr.f32.mxu0 0.0
    %153 = vmatmul.mubr.f32.gmra.mxu0 %v62
    %v154 = vpop.f32.mrf.mxu0
    %v155 = vadd.f32 %v86, %v154
    %v156 = vpop.f32.mrf.mxu0
    %157 = vmatprep.mubr.f32.mxu0 0.0
    %158 = vmatmul.mubr.f32.gmra.mxu0 %v63
    %v159 = vpop.f32.mrf.mxu0
    %v160 = vadd.f32 %v86, %v159
    %v161 = vpop.f32.mrf.mxu0
    %162 = vdwg.mxu0
    %v163 = vmax.f32 %v155, 0.0
    %v164 = vmax.f32 %v160, 0.0
    %v165 = vld [vmem:[#allocation7] sm:$0xff]
    %v166 = vld [vmem:[#allocation7 + $0x8] sm:$0xff]
    %v167 = vld [vmem:[#allocation7 + $0x10] sm:$0xff]
    %v168 = vld [vmem:[#allocation7 + $0x18] sm:$0xff]
    %v169 = vld [vmem:[#allocation7 + $0x20] sm:$0xff]
    %v170 = vld [vmem:[#allocation7 + $0x28] sm:$0xff]
    %v171 = vld [vmem:[#allocation7 + $0x30] sm:$0xff]
    %v172 = vld [vmem:[#allocation7 + $0x38] sm:$0xff]
    %v173 = vld [vmem:[#allocation7 + $0x40] sm:$0xff]
    %v174 = vld [vmem:[#allocation7 + $0x48] sm:$0xff]
    %v175 = vld [vmem:[#allocation7 + $0x50] sm:$0xff]
    %v176 = vld [vmem:[#allocation7 + $0x58] sm:$0xff]
    %v177 = vld [vmem:[#allocation7 + $0x60] sm:$0xff]
    %v178 = vld [vmem:[#allocation7 + $0x68] sm:$0xff]
    %v179 = vld [vmem:[#allocation7 + $0x70] sm:$0xff]
    %v180 = vld [vmem:[#allocation7 + $0x78] sm:$0xff]
    %v182 = vlaneseq
    %v183 = vshrl.u32 %v182, 7
    %v184 = vsub.s32 0, %v183
    %v185 = vrot.slane %v65, %v184
    %187 = vmatprep.subr.mxu0 0.0
    %188 = vmatpush1.msra.mxu0 %v180
    %189 = vmatprep.subr.mxu0 0.0
    %190 = vmatpush1.msra.mxu0 %v179
    %191 = vmatprep.subr.mxu0 0.0
    %192 = vmatpush1.msra.mxu0 %v178
    %193 = vmatprep.subr.mxu0 0.0
    %194 = vmatpush1.msra.mxu0 %v177
    %195 = vmatprep.subr.mxu0 0.0
    %196 = vmatpush1.msra.mxu0 %v176
    %197 = vmatprep.subr.mxu0 0.0
    %198 = vmatpush1.msra.mxu0 %v175
    %199 = vmatprep.subr.mxu0 0.0
    %200 = vmatpush1.msra.mxu0 %v174
    %201 = vmatprep.subr.mxu0 0.0
    %202 = vmatpush1.msra.mxu0 %v173
    %203 = vmatprep.subr.mxu0 0.0
    %204 = vmatpush1.msra.mxu0 %v172
    %205 = vmatprep.subr.mxu0 0.0
    %206 = vmatpush1.msra.mxu0 %v171
    %207 = vmatprep.subr.mxu0 0.0
    %208 = vmatpush1.msra.mxu0 %v170
    %209 = vmatprep.subr.mxu0 0.0
    %210 = vmatpush1.msra.mxu0 %v169
    %211 = vmatprep.subr.mxu0 0.0
    %212 = vmatpush1.msra.mxu0 %v168
    %213 = vmatprep.subr.mxu0 0.0
    %214 = vmatpush1.msra.mxu0 %v167
    %215 = vmatprep.subr.mxu0 0.0
    %216 = vmatpush1.msra.mxu0 %v166
    %217 = vmatprep.subr.mxu0 0.0
    %218 = vmatpush1.msra.mxu0 %v165
    %219 = vmatprep.subr.mxu0 0.0
    %220 = vmatpush2.msra.mxu0 0.0
    %221 = vmatprep.subr.mxu0 0.0
    %222 = vmatpush2.msra.mxu0 0.0
    %223 = vmatprep.subr.mxu0 0.0
    %224 = vmatpush2.msra.mxu0 0.0
    %225 = vmatprep.subr.mxu0 0.0
    %226 = vmatpush2.msra.mxu0 0.0
    %227 = vmatprep.subr.mxu0 0.0
    %228 = vmatpush2.msra.mxu0 0.0
    %229 = vmatprep.subr.mxu0 0.0
    %230 = vmatpush2.msra.mxu0 0.0
    %231 = vmatprep.subr.mxu0 0.0
    %232 = vmatpush2.msra.mxu0 0.0
    %233 = vmatprep.subr.mxu0 0.0
    %234 = vmatpush2.msra.mxu0 0.0
    %235 = vmatprep.subr.mxu0 0.0
    %236 = vmatpush2.msra.mxu0 0.0
    %237 = vmatprep.subr.mxu0 0.0
    %238 = vmatpush2.msra.mxu0 0.0
    %239 = vmatprep.subr.mxu0 0.0
    %240 = vmatpush2.msra.mxu0 0.0
    %241 = vmatprep.subr.mxu0 0.0
    %242 = vmatpush2.msra.mxu0 0.0
    %243 = vmatprep.subr.mxu0 0.0
    %244 = vmatpush2.msra.mxu0 0.0
    %245 = vmatprep.subr.mxu0 0.0
    %246 = vmatpush2.msra.mxu0 0.0
    %247 = vmatprep.subr.mxu0 0.0
    %248 = vmatpush2.msra.mxu0 0.0
    %249 = vmatprep.subr.mxu0 0.0
    %250 = vmatpush2.msra.mxu0 0.0
    %251 = vmatprep.mubr.f32.mxu0 0.0
    %252 = vmatmul.mubr.f32.gmra.mxu0 %v163
    %v253 = vpop.f32.mrf.mxu0
    %v254 = vadd.f32 %v185, %v253
    %v255 = vpop.f32.mrf.mxu0
    %256 = vmatprep.mubr.f32.mxu0 0.0
    %257 = vmatmul.mubr.f32.gmra.mxu0 %v164
    %v258 = vpop.f32.mrf.mxu0
    %v259 = vadd.f32 %v185, %v258
    %v260 = vpop.f32.mrf.mxu0
    %261 = vdwg.mxu0
    %v262 = vmax.f32 %v254, 0.0
    %v263 = vmax.f32 %v259, 0.0
    %264 = vst [vmem:[#allocation8] sm:$0xff] %v262
    %265 = vst [vmem:[#allocation8 + $0x8] sm:$0xff] %v263
    // Predicated region
    $region34: #{tpu_custom_call.1} parent=1 // pred_check
      _
    $region35: #{tpu_custom_call.1} parent=1 // pred_check_branch
      %267 = sbr.rel (0) target = $region37
    $region36: #{tpu_custom_call.1} parent=1 // pred_region
      %s269 = ssub.s32 256, 256
      %270 = vsyncadd [#allocation4], %s269
      %s271 = sshll.u32 [#allocation8], 4
      %s272 = int_to_ptr.vmem [resolvable:$true] %s271
      %277 = dma.vmem_to_hbm [thread:$0]  %s272, 256, %s5, [#allocation4], 128, 128, 8
    $region37: #{tpu_custom_call.1} parent=1 // pred_fallthru
      _
    // Predicated region
    $region38: #{tpu_custom_call.1} parent=1 // pred_check
      _
    $region39: #{tpu_custom_call.1} parent=1 // pred_check_branch
      %279 = sbr.rel (0) target = $region41
    $region40: #{tpu_custom_call.1} parent=1 // pred_region
      %280 = dma.done [#allocation4], 256
    $region41: #{tpu_custom_call.1} parent=1 // pred_fallthru
      _
    %281 = vsyncpa [#allocation3], 1
    %282 = vsyncpa [#allocation6], 1
    %283 = vsyncpa [#allocation4], 1

</llo_original>
